<compile_context>
chip_gen: v6e
topology: v6e:2x2x1
jax: 0.10.0
libtpu: 0.0.40
codegen_flags: <defaults>
</compile_context>

<pallas_src>
import functools

import jax
import jax.numpy as jnp
from jax import lax
from jax.experimental import pallas as pl
from jax.experimental.pallas import tpu as pltpu

_LANES = 128
_CHUNK_ROWS = 512          # ~256 KiB f32 per chunk intermediate, independent of tile size


def _round_down(v, m):
    return (v // m) * m


def _sublane_multiple(dtype):
    bits = jnp.dtype(dtype).itemsize * 8
    return max(8, 256 // bits)   # 8 for 32-bit, 16 for bf16, 32 for 8-bit dtypes


def _chip_params():
    """(num_tensorcores, target bytes per input block) for the local TPU generation."""
    kind = ""
    try:
        kind = jax.devices()[0].device_kind.lower()
    except Exception:
        pass
    if "7" in kind:                      # v7x: 2 TCs, 3.2 TB/s HBM -> big blocks pay off
        return 2, 4 << 20
    if "v6" in kind or "6e" in kind:     # v6e: 1 TC, 32 MiB scoped-VMEM default
        return 1, 4 << 20
    return 1, 2 << 20                    # v5e / unknown: stay well under 16 MiB default


def _sse_kernel(x_ref, t_ref, acc_ref, *, tile_rows, chunk_rows,
                tiles_per_core, rows_valid, any_ragged):
    """Accumulate sum((x - t)^2) of this tile into a resident (8, 128) f32 block."""
    c = pl.program_id(0)          # core / partial-sum axis ("parallel")
    i = pl.program_id(1)          # sequential reduction axis ("arbitrary")

    @pl.when(i == 0)
    def _():
        acc_ref[...] = jnp.zeros_like(acc_ref)

    g = c * tiles_per_core + i    # global tile index (unclamped; clamped tiles get masked)
    tile_row0 = g * tile_rows     # first global row covered by this grid step

    n_chunks = tile_rows // chunk_rows
    rem_rows = tile_rows - n_chunks * chunk_rows

    def add_chunk(base, nrows, masked):
        """Fold sum of squared diffs of a (nrows, 128) slice into the (8, 128) acc."""
        xd = x_ref[pl.ds(base, nrows), :].astype(jnp.float32)
        td = t_ref[pl.ds(base, nrows), :].astype(jnp.float32)
        d = xd - td
        sq = d * d
        if masked:
            # Only emitted on edge tiles: zero rows past the end of the valid data
            # (ragged last tile and/or clamped duplicated tiles of an uneven split).
            ridx = lax.broadcasted_iota(jnp.int32, (nrows, _LANES), 0)
            sq = jnp.where(tile_row0 + base + ridx < rows_valid, sq, jnp.float32(0.0))
        # Fold nrows -> 8 sublanes with pure VPU adds (free reshape, no XLU).
        r8 = (nrows // 8) * 8
        if r8:
            acc_ref[...] += sq[:r8].reshape(r8 // 8, 8, _LANES).sum(axis=0)
        if nrows - r8:  # tiny single-tile case where rows isn't a multiple of 8
            acc_ref[0:nrows - r8, :] += sq[r8:, :]

    def tile_body(masked):
        if n_chunks == 1 and rem_rows == 0:
            add_chunk(0, tile_rows, masked)
        else:
            @pl.loop(0, n_chunks)
            def _(j):
                add_chunk(pl.multiple_of(j * chunk_rows, chunk_rows),
                          chunk_rows, masked)
            if rem_rows:
                add_chunk(n_chunks * chunk_rows, rem_rows, masked)

    if any_ragged:
        is_edge = tile_row0 + tile_rows > rows_valid

        @pl.when(is_edge)
        def _():
            tile_body(masked=True)

        @pl.when(jnp.logical_not(is_edge))
        def _():
            tile_body(masked=False)
    else:
        tile_body(masked=False)


def content_loss(x, target, *, tile_rows=None, num_cores=None):
    """Mirror ContentLoss.forward: returns (input_passthrough, mse_loss)."""
    assert x.shape == target.shape, "input/target shape mismatch"
    n = x.size
    xf = x.reshape(-1)
    tf = target.reshape(-1)

    rows = n // _LANES                 # 128-aligned prefix handled by the kernel
    n_main = rows * _LANES
    n_tail = n - n_main

    chip_cores, block_bytes = _chip_params()
    itemsize = jnp.dtype(x.dtype).itemsize
    mult = _sublane_multiple(x.dtype)

    sse_main = jnp.float32(0.0)
    if rows > 0:
        # Prefix view (no full-array zero-pad copies in the ragged case).
        if n_tail:
            x2d = xf[:n_main].reshape(rows, _LANES)
            t2d = tf[:n_main].reshape(rows, _LANES)
        else:
            x2d = xf.reshape(rows, _LANES)
            t2d = tf.reshape(rows, _LANES)

        # Tile size: big enough that HBM streaming (not per-step overhead) sets the
        # runtime, sized per generation so 2 inputs x 2 pipeline buffers stay inside
        # the default scoped-VMEM budget everywhere.
        if tile_rows is None:
            tile_rows = block_bytes // (_LANES * itemsize)
        tile_rows = int(max(mult, min(int(tile_rows), 32768)))
        if rows > tile_rows:
            tr = max(mult, _round_down(tile_rows, mult))
        else:
            tr = rows                                   # single full-extent tile
        num_tiles = -(-rows // tr)

        # Split across TensorCores only on chips that have more than one (v7x);
        # on 1-TC chips the split is a serial loop plus a wasted duplicated-tile DMA.
        if num_cores is None:
            num_cores = chip_cores
        num_cores = 1 if num_tiles < 2 else min(2, int(num_cores))
        tiles_per_core = -(-num_tiles // num_cores)
        any_ragged = (num_cores * tiles_per_core * tr) != rows

        chunk_rows = min(tr, _CHUNK_ROWS)

        kernel = functools.partial(
            _sse_kernel, tile_rows=tr, chunk_rows=chunk_rows,
            tiles_per_core=tiles_per_core, rows_valid=rows, any_ragged=any_ragged)

        def in_map(c, i):
            g = c * tiles_per_core + i
            return (jnp.minimum(g, num_tiles - 1), 0)   # clamp; extras are zero-masked

        partials = pl.pallas_call(
            kernel,
            out_shape=jax.ShapeDtypeStruct((num_cores, 8, _LANES), jnp.float32),
            grid_spec=pltpu.PrefetchScalarGridSpec(
                num_scalar_prefetch=0,
                grid=(num_cores, tiles_per_core),
                in_specs=[
                    pl.BlockSpec((tr, _LANES), in_map),
                    pl.BlockSpec((tr, _LANES), in_map),
                ],
                out_specs=pl.BlockSpec((None, 8, _LANES), lambda c, i: (c, 0, 0)),
            ),
            compiler_params=pltpu.CompilerParams(
                dimension_semantics=("parallel", "arbitrary")),
            cost_estimate=pl.CostEstimate(
                flops=3 * n_main,
                transcendentals=0,
                bytes_accessed=2 * n_main * itemsize + num_cores * 8 * _LANES * 4),
        )(x2d, t2d)
        sse_main = jnp.sum(partials)

    if n_tail:
        xt = xf[n_main:].astype(jnp.float32)
        tt = tf[n_main:].astype(jnp.float32)
        sse_tail = jnp.sum((xt - tt) * (xt - tt))
    else:
        sse_tail = jnp.float32(0.0)

    loss = (sse_main + sse_tail) * (1.0 / n)
    # ContentLoss.forward returns its input unchanged (loss is a side product).
    return x, loss


if __name__ == "__main__":
    key = jax.random.PRNGKey(0)
    kx, kt = jax.random.split(key)

    def check(shape, dtype=jnp.float32, **kw):
        xi = jax.random.normal(kx, shape, dtype=dtype)
        ti = jax.random.normal(kt, shape, dtype=dtype)   # "detached" target
        out, loss = jax.block_until_ready(content_loss(xi, ti, **kw))
        ref = jnp.mean((xi.astype(jnp.float32) - ti.astype(jnp.float32)) ** 2)
        assert out.shape == xi.shape and out.dtype == xi.dtype
        assert bool(jnp.all(out == xi))
        tol = 1e-4 * max(1.0, abs(float(ref)))
        assert abs(float(loss) - float(ref)) < tol, (shape, kw, float(loss), float(ref))

    # Small NCHW feature maps, as produced by a conv layer in style transfer.
    check((2, 4, 16, 16))

    # Multi-tile, ragged last tile (edge-only masking path).
    check((2, 8, 36, 48), tile_rows=32)

    # Forced 2-partial-sum split (exercises clamped duplicated-tile masking even on 1-TC chips).
    check((2, 8, 36, 48), tile_rows=32, num_cores=2)

    # Size not a multiple of 128: kernel on the aligned prefix + wrapper-side tail sum.
    check((3, 5, 7, 11))

    print("KERNEL_OK")
</pallas_src>

<mosaic_0001>
module attributes {stable_mosaic.version = 11 : i64} {
  func.func @_sse_kernel(%arg0: i32, %arg1: i32, %arg2: memref<16x128xf32, #tpu.memory_space<vmem>>, %arg3: memref<16x128xf32, #tpu.memory_space<vmem>>, %arg4: memref<1x8x128xf32, #tpu.memory_space<vmem>>) attributes {dimension_semantics = [#tpu.dimension_semantics<parallel>, #tpu.dimension_semantics<arbitrary>], iteration_bounds = array<i64: 1, 1>, scalar_prefetch = 0 : i64, scratch_operands = 0 : i64, tpu.core_type = #tpu.core_type<tc>, window_params = [{transform_indices = @transform_0, window_bounds = array<i64: 16, 128>}, {transform_indices = @transform_1, window_bounds = array<i64: 16, 128>}, {transform_indices = @transform_2, window_bounds = array<i64: 1, 8, 128>}]} {
    %c0_i32 = arith.constant 0 : i32
    %0 = arith.cmpi eq, %arg1, %c0_i32 : i32
    %1 = arith.extui %0 : i1 to i32
    %c0_i32_0 = arith.constant 0 : i32
    %2 = arith.cmpi ne, %1, %c0_i32_0 : i32
    scf.if %2 {
      %cst_10 = arith.constant 0.000000e+00 : f32
      %15 = vector.broadcast %cst_10 : f32 to vector<8x128xf32>
      %c0_11 = arith.constant 0 : index
      %c0_12 = arith.constant 0 : index
      %c0_13 = arith.constant 0 : index
      %16 = vector.load %arg4[%c0_11, %c0_12, %c0_13] : memref<1x8x128xf32, #tpu.memory_space<vmem>>, vector<1x8x128xf32>
      %17 = vector.shape_cast %16 : vector<1x8x128xf32> to vector<8x128xf32>
      %18 = vector.shape_cast %15 : vector<8x128xf32> to vector<1x8x128xf32>
      tpu.vector_store %arg4[%c0_11, %c0_12, %c0_13], %18 {strides = array<i32>} : memref<1x8x128xf32, #tpu.memory_space<vmem>>, vector<1x8x128xf32>,
    } else {
    }
    %c0 = arith.constant 0 : index
    %c0_1 = arith.constant 0 : index
    %3 = vector.load %arg2[%c0, %c0_1] : memref<16x128xf32, #tpu.memory_space<vmem>>, vector<16x128xf32>
    %c0_2 = arith.constant 0 : index
    %c0_3 = arith.constant 0 : index
    %4 = vector.load %arg3[%c0_2, %c0_3] : memref<16x128xf32, #tpu.memory_space<vmem>>, vector<16x128xf32>
    %5 = arith.subf %3, %4 : vector<16x128xf32>
    %6 = arith.mulf %5, %5 : vector<16x128xf32>
    %c0_4 = arith.constant 0 : index
    %c0_5 = arith.constant 0 : index
    %c0_6 = arith.constant 0 : index
    %7 = vector.load %arg4[%c0_4, %c0_5, %c0_6] : memref<1x8x128xf32, #tpu.memory_space<vmem>>, vector<1x8x128xf32>
    %8 = vector.shape_cast %7 : vector<1x8x128xf32> to vector<8x128xf32>
    %9 = vector.shape_cast %6 : vector<16x128xf32> to vector<2x8x128xf32>
    %cst = arith.constant dense<0.000000e+00> : vector<8x128xf32>
    %10 = vector.multi_reduction <add>, %9, %cst [0] : vector<2x8x128xf32> to vector<8x128xf32>
    %11 = arith.addf %8, %10 : vector<8x128xf32>
    %c0_7 = arith.constant 0 : index
    %c0_8 = arith.constant 0 : index
    %c0_9 = arith.constant 0 : index
    %12 = vector.load %arg4[%c0_7, %c0_8, %c0_9] : memref<1x8x128xf32, #tpu.memory_space<vmem>>, vector<1x8x128xf32>
    %13 = vector.shape_cast %12 : vector<1x8x128xf32> to vector<8x128xf32>
    %14 = vector.shape_cast %11 : vector<8x128xf32> to vector<1x8x128xf32>
    tpu.vector_store %arg4[%c0_7, %c0_8, %c0_9], %14 {strides = array<i32>} : memref<1x8x128xf32, #tpu.memory_space<vmem>>, vector<1x8x128xf32>,
    return
  }
  func.func @transform_0(%arg0: i32, %arg1: i32) -> (i32, i32) {
    %c1_i32 = arith.constant 1 : i32
    %0 = arith.muli %arg0, %c1_i32 : i32
    %1 = arith.addi %0, %arg1 : i32
    %c0_i32 = arith.constant 0 : i32
    %2 = arith.minsi %1, %c0_i32 : i32
    %c0_i32_0 = arith.constant 0 : i32
    %c0_i32_1 = arith.constant 0 : i32
    return %2, %c0_i32_0 : i32, i32
  }
  func.func @transform_1(%arg0: i32, %arg1: i32) -> (i32, i32) {
    %c1_i32 = arith.constant 1 : i32
    %0 = arith.muli %arg0, %c1_i32 : i32
    %1 = arith.addi %0, %arg1 : i32
    %c0_i32 = arith.constant 0 : i32
    %2 = arith.minsi %1, %c0_i32 : i32
    %c0_i32_0 = arith.constant 0 : i32
    %c0_i32_1 = arith.constant 0 : i32
    return %2, %c0_i32_0 : i32, i32
  }
  func.func @transform_2(%arg0: i32, %arg1: i32) -> (i32, i32, i32) {
    %c0_i32 = arith.constant 0 : i32
    %c0_i32_0 = arith.constant 0 : i32
    %c0_i32_1 = arith.constant 0 : i32
    return %arg0, %c0_i32, %c0_i32_0 : i32, i32, i32
  }
}

</mosaic_0001>

<llo_original>
// kernel: tpu_custom_call.1
$region0: #{tpu_custom_call.1}
  #allocation0 [shape = 'u32[]', space=smem, size = 0x4, offset = 0x4, fixed_abs, tag = 'smem constant byte address 0x4 - core index']
  #allocation1 [shape = 'u32[144,128]{1,0:T(1,128)}', space=vmem, size = 0x12000, scoped, tag = 'internal scratch']
  %s0 = inlined_call_operand.hbm [shape: f32[16,128], index: 0, kind: input, shape index: {}]
  %s1 = inlined_call_operand.hbm [shape: f32[16,128], index: 1, kind: input, shape index: {}]
  %s2 = inlined_call_operand.hbm [shape: f32[1,8,128], index: 2, kind: output, shape index: {}]
  %s3 = sld [smem:[#allocation0]]
  $region30: #{tpu_custom_call.1} parent=0
    _
  %s5 = ssub.s32 1, %s3
  %s6 = scalar_select 0, %s5, %s3
  $region1: #{tpu_custom_call.1} parent=0
    #allocation2 [shape = 'u8[8192]{0}', space=vmem, size = 0x2000, scoped, tag = 'input window, operand 0, single buffered']
    #allocation3 [shape = 's32[1]{0}', space=sflag, size = 0x4, scoped, tag = 'scoped memory for tpu_custom_call.1']
    #allocation4 [shape = 's32[1]{0}', space=sflag, size = 0x4, scoped, tag = 'scoped memory for tpu_custom_call.1']
    #allocation5 [shape = 'u8[8192]{0}', space=vmem, size = 0x2000, scoped, tag = 'input window, operand 1, single buffered']
    #allocation6 [shape = 's32[1]{0}', space=sflag, size = 0x4, scoped, tag = 'scoped memory for tpu_custom_call.1']
    #allocation7 [shape = 'u8[4096]{0}', space=vmem, size = 0x1000, scoped, tag = 'output window, operand 0, single buffered']
    %7 = vsyncpa [#allocation3], 0
    %8 = vsyncpa [#allocation6], 0
    %9 = vsyncpa [#allocation4], 0
    // Predicated region
    $region2: #{tpu_custom_call.1} parent=1 // pred_check
      _
    $region3: #{tpu_custom_call.1} parent=1 // pred_check_branch
      %11 = sbr.rel (0) target = $region5
    $region4: #{tpu_custom_call.1} parent=1 // pred_region
      %s12 = sadd.s32 0, 0
      %p13 = scmp.lt.s32.totalorder %s12, 0
      %s14 = scalar_select %p13, %s12, 0
      %s15 = smul.u32 2, %s14
      %s17 = ssub.s32 256, 256
      %18 = vsyncadd [#allocation3], %s17
      %s19 = smul.addr %s15, 128
      %s20 = scalar_lea.hbm %s0, %s19
      %s21 = sshll.u32 [#allocation2], 4
      %s22 = int_to_ptr.vmem [resolvable:$true] %s21
      %27 = dma.hbm_to_vmem [thread:$0]  %s20, 256, %s22, [#allocation3], 128, 128, 8
    $region5: #{tpu_custom_call.1} parent=1 // pred_fallthru
      _
    // Predicated region
    $region6: #{tpu_custom_call.1} parent=1 // pred_check
      _
    $region7: #{tpu_custom_call.1} parent=1 // pred_check_branch
      %29 = sbr.rel (0) target = $region9
    $region8: #{tpu_custom_call.1} parent=1 // pred_region
      %s30 = sadd.s32 0, 0
      %p31 = scmp.lt.s32.totalorder %s30, 0
      %s32 = scalar_select %p31, %s30, 0
      %s33 = smul.u32 2, %s32
      %s35 = ssub.s32 256, 256
      %36 = vsyncadd [#allocation6], %s35
      %s37 = smul.addr %s33, 128
      %s38 = scalar_lea.hbm %s1, %s37
      %s39 = sshll.u32 [#allocation5], 4
      %s40 = int_to_ptr.vmem [resolvable:$true] %s39
      %45 = dma.hbm_to_vmem [thread:$0]  %s38, 256, %s40, [#allocation6], 128, 128, 8
    $region9: #{tpu_custom_call.1} parent=1 // pred_fallthru
      _
    // Predicated region
    $region10: #{tpu_custom_call.1} parent=1 // pred_check
      _
    $region11: #{tpu_custom_call.1} parent=1 // pred_check_branch
      %47 = sbr.rel (0) target = $region13
    $region12: #{tpu_custom_call.1} parent=1 // pred_region
      %48 = dma.done [#allocation3], 256
    $region13: #{tpu_custom_call.1} parent=1 // pred_fallthru
      _
    // Predicated region
    $region14: #{tpu_custom_call.1} parent=1 // pred_check
      _
    $region15: #{tpu_custom_call.1} parent=1 // pred_check_branch
      %50 = sbr.rel (0) target = $region17
    $region16: #{tpu_custom_call.1} parent=1 // pred_region
      %51 = dma.done [#allocation6], 256
    $region17: #{tpu_custom_call.1} parent=1 // pred_fallthru
      _
    %s52 = sadd.s32 0, 0
    %p53 = scmp.lt.s32.totalorder %s52, 0
    %s54 = scalar_select %p53, %s52, 0
    %s55 = smul.u32 2, %s54
    %s56 = sadd.s32 0, 0
    %p57 = scmp.lt.s32.totalorder %s56, 0
    %s58 = scalar_select %p57, %s56, 0
    %s59 = smul.u32 2, %s58
    %p60 = scmp.eq.s32.totalorder 0, 0
    // Predicated region
    $region18: #{tpu_custom_call.1} parent=1 // pred_check
      %p61 = pneg %p60
    $region19: #{tpu_custom_call.1} parent=1 // pred_check_branch
      %63 = sbr.rel (%p61) target = $region21
    $region20: #{tpu_custom_call.1} parent=1 // pred_region
      %64 = vst [vmem:[#allocation7] sm:$0xff] 0.0
    $region21: #{tpu_custom_call.1} parent=1 // pred_fallthru
      _
    %v65 = vld [vmem:[#allocation2] sm:$0xff]
    %v66 = vld [vmem:[#allocation2 + $0x8] sm:$0xff]
    %v67 = vld [vmem:[#allocation5] sm:$0xff]
    %v68 = vld [vmem:[#allocation5 + $0x8] sm:$0xff]
    %v69 = vsub.f32 %v65, %v67
    %v70 = vsub.f32 %v66, %v68
    %v71 = vmul.f32 %v69, %v69
    %v72 = vmul.f32 %v70, %v70
    %v73 = vld [vmem:[#allocation7] sm:$0xff]
    %v74 = vadd.f32 %v71, %v72
    %v75 = vadd.f32 %v73, %v74
    %76 = vst [vmem:[#allocation7] sm:$0xff] %v75
    // Predicated region
    $region22: #{tpu_custom_call.1} parent=1 // pred_check
      _
    $region23: #{tpu_custom_call.1} parent=1 // pred_check_branch
      %78 = sbr.rel (0) target = $region25
    $region24: #{tpu_custom_call.1} parent=1 // pred_region
      %s80 = ssub.s32 128, 128
      %81 = vsyncadd [#allocation4], %s80
      %s83 = sshll.u32 [#allocation7], 4
      %s84 = int_to_ptr.vmem [resolvable:$true] %s83
      %86 = dma.vmem_to_hbm [thread:$0]  %s84, 128, %s2, [#allocation4]
    $region25: #{tpu_custom_call.1} parent=1 // pred_fallthru
      _
    // Predicated region
    $region26: #{tpu_custom_call.1} parent=1 // pred_check
      _
    $region27: #{tpu_custom_call.1} parent=1 // pred_check_branch
      %88 = sbr.rel (0) target = $region29
    $region28: #{tpu_custom_call.1} parent=1 // pred_region
      %89 = dma.done [#allocation4], 128
    $region29: #{tpu_custom_call.1} parent=1 // pred_fallthru
      _
    %90 = vsyncpa [#allocation3], 1
    %91 = vsyncpa [#allocation6], 1
    %92 = vsyncpa [#allocation4], 1

</llo_original>
